<compile_context>
chip_gen: v6e
topology: v6e:2x2x1
jax: 0.10.0
libtpu: 0.0.40
codegen_flags: <defaults>
</compile_context>

<pallas_src>
import functools
import math

import jax
import jax.numpy as jnp
from jax.experimental import pallas as pl
from jax.experimental.pallas import tpu as pltpu


# ----------------------------- Pallas kernels -------------------------------

def _gelu_f32(x):
    # exact GELU (matches torch.nn.functional.gelu default, erf-based)
    return 0.5 * x * (1.0 + jax.lax.erf(x * (1.0 / math.sqrt(2.0))))


def _mm_kernel(x_ref, w_ref, b_ref, *rest, gelu_in, gelu_out, has_residual):
    if has_residual:
        r_ref, o_ref = rest
    else:
        (o_ref,) = rest
    x = x_ref[...]                      # f32 activation tile
    if gelu_in:
        x = _gelu_f32(x)
    # bf16 x bf16 -> f32 accumulation on the MXU
    acc = jnp.dot(x.astype(jnp.bfloat16), w_ref[...],
                  preferred_element_type=jnp.float32)
    acc = acc + b_ref[...]
    if has_residual:
        acc = acc + r_ref[...]
    if gelu_out:
        acc = _gelu_f32(acc)
    o_ref[...] = acc


def _pick_tm(M):
    """Row-tile size: biggest power-of-two tile (<=256) that divides M."""
    for tm in (256, 128, 64, 32, 16, 8):
        if M % tm == 0:
            return tm
    return M


def matmul_bias(x2d, w, b, *, gelu_in, gelu_out=False, residual=None):
    """o = [gelu](([gelu](x2d)) @ w + b [+ residual]).

    x2d:(M,K) f32, w:(K,N) f32 (cast to bf16), b:(N,), residual:(M,N) or None.
    Tiled over M; weight/bias blocks are reused across row tiles.
    """
    assert not (gelu_out and residual is not None)
    M, K = x2d.shape
    N = w.shape[1]
    w_bf = w.astype(jnp.bfloat16)
    b2d = b.reshape(1, N)
    tm = _pick_tm(M)
    grid = (M // tm,)

    in_specs = [
        pl.BlockSpec((tm, K), lambda i: (i, 0)),   # activation row tile
        pl.BlockSpec((K, N), lambda i: (0, 0)),    # weight (VMEM-resident)
        pl.BlockSpec((1, N), lambda i: (0, 0)),    # bias
    ]
    args = [x2d, w_bf, b2d]
    has_residual = residual is not None
    if has_residual:
        in_specs.append(pl.BlockSpec((tm, N), lambda i: (i, 0)))
        args.append(residual)

    kern = functools.partial(_mm_kernel, gelu_in=gelu_in, gelu_out=gelu_out,
                             has_residual=has_residual)
    return pl.pallas_call(
        kern,
        grid=grid,
        in_specs=in_specs,
        out_specs=pl.BlockSpec((tm, N), lambda i: (i, 0)),
        out_shape=jax.ShapeDtypeStruct((M, N), jnp.float32),
        compiler_params=pltpu.CompilerParams(
            dimension_semantics=("parallel",)),   # v7x: split rows across TCs
    )(*args)


def _latent_kernel(qm_ref, qv_ref, pm_ref, pv_ref, eps_ref, z_ref, kl_ref):
    qm = qm_ref[...]
    qv = qv_ref[...]
    pm = pm_ref[...]
    pv = pv_ref[...]
    e_q = jnp.exp(qv)                         # single transcendental, reused
    # draw_gaussian_diag_samples: z = exp(logsigma_q) * eps + mu_q
    z_ref[...] = e_q * eps_ref[...] + qm
    # gaussian_analytical_kl(qm, pm, qv, pv)
    kl_ref[...] = (-0.5 + pv - qv
                   + 0.5 * (e_q * e_q + (qm - pm) ** 2) * jnp.exp(-2.0 * pv))


def sample_and_kl(qm, qv, pm, pv, eps):
    """Lane-dense fused sample + KL.  Inputs all the same shape."""
    shape = qm.shape
    n = qm.size
    pad = (-n) % 128

    def prep(a):
        a = a.reshape(-1)
        if pad:
            a = jnp.pad(a, (0, pad))
        return a.reshape(-1, 128)

    flat = [prep(a) for a in (qm, qv, pm, pv, eps)]
    R = flat[0].shape[0]
    spec = pl.BlockSpec((R, 128), lambda i: (0, 0))
    z, kl = pl.pallas_call(
        _latent_kernel,
        grid=(1,),
        in_specs=[spec] * 5,
        out_specs=[spec, spec],
        out_shape=[jax.ShapeDtypeStruct((R, 128), jnp.float32)] * 2,
    )(*flat)

    def unprep(a):
        a = a.reshape(-1)
        if pad:
            a = a[:n]
        return a.reshape(shape)

    return unprep(z), unprep(kl)


def _scale_shift_kernel(x_ref, g_ref, b_ref, o_ref):
    o_ref[...] = x_ref[...] * g_ref[...] + b_ref[...]


def scale_shift(x_nhwc, gain, bias):
    """final_fn: x * gain + bias (per-channel), lane-dense when possible."""
    B, H, W, C = x_nhwc.shape
    n = B * H * W * C
    if (128 % C == 0) and (n % 128 == 0):
        rep = 128 // C
        g = jnp.tile(gain, (rep,)).reshape(1, 128)
        bb = jnp.tile(bias, (rep,)).reshape(1, 128)
        x2 = x_nhwc.reshape(-1, 128)
        R = x2.shape[0]
        out = pl.pallas_call(
            _scale_shift_kernel,
            grid=(1,),
            in_specs=[pl.BlockSpec((R, 128), lambda i: (0, 0)),
                      pl.BlockSpec((1, 128), lambda i: (0, 0)),
                      pl.BlockSpec((1, 128), lambda i: (0, 0))],
            out_specs=pl.BlockSpec((R, 128), lambda i: (0, 0)),
            out_shape=jax.ShapeDtypeStruct((R, 128), jnp.float32),
        )(x2, g, bb)
        return out.reshape(B, H, W, C)
    # fallback: channels on lanes (masked stores, tiny kernel)
    M = B * H * W
    out = pl.pallas_call(
        _scale_shift_kernel,
        grid=(1,),
        in_specs=[pl.BlockSpec((M, C), lambda i: (0, 0)),
                  pl.BlockSpec((1, C), lambda i: (0, 0)),
                  pl.BlockSpec((1, C), lambda i: (0, 0))],
        out_specs=pl.BlockSpec((M, C), lambda i: (0, 0)),
        out_shape=jax.ShapeDtypeStruct((M, C), jnp.float32),
    )(x_nhwc.reshape(M, C), gain.reshape(1, C), bias.reshape(1, C))
    return out.reshape(B, H, W, C)


# ------------------------------ conv helpers ---------------------------------

def conv1x1(x, w, b, *, gelu_in, gelu_out=False, residual=None):
    # x: (B,H,W,Cin), w: (Cin,Cout)
    B, H, W, Cin = x.shape
    r2 = residual.reshape(B * H * W, -1) if residual is not None else None
    y = matmul_bias(x.reshape(B * H * W, Cin), w, b,
                    gelu_in=gelu_in, gelu_out=gelu_out, residual=r2)
    return y.reshape(B, H, W, -1)


def conv3x3(x, w, b, *, gelu_out=False, residual=None):
    # x: (B,H,W,Cin) — already GELU'd by the producing conv's epilogue.
    # w: (3,3,Cin,Cout); padding=1.  GELU(0)=0, so pre-GELU + zero-pad matches
    # the reference GELU-then-conv(pad=1) semantics exactly.
    # TODO(synk): replace im2col with an in-kernel 9-tap accumulation grid to
    # cut the 9x HBM traffic for large generations; negligible at these sizes.
    B, H, W, Cin = x.shape
    Cout = w.shape[-1]
    xp = jnp.pad(x, ((0, 0), (1, 1), (1, 1), (0, 0)))
    patches = [xp[:, dy:dy + H, dx:dx + W, :]
               for dy in range(3) for dx in range(3)]
    col = jnp.concatenate(patches, axis=-1).reshape(B * H * W, 9 * Cin)
    r2 = residual.reshape(B * H * W, Cout) if residual is not None else None
    y = matmul_bias(col, w.reshape(9 * Cin, Cout), b,
                    gelu_in=False, gelu_out=gelu_out, residual=r2)
    return y.reshape(B, H, W, Cout)


def block_apply(p, x, *, residual):
    # VDVAE Block: c1 -> c2 -> c3 -> c4, GELU before each conv.
    # GELU preceding a 3x3 conv is fused into the previous conv's epilogue
    # (gelu_out); GELU preceding a 1x1 conv is fused into that conv's prologue.
    # The residual add (x + xhat) is fused into c4's epilogue.
    convs = [p['c1'], p['c2'], p['c3'], p['c4']]
    h = x
    for idx, cp in enumerate(convs):
        is_3x3 = cp['w'].ndim == 4
        gelu_out = (idx < 3) and (convs[idx + 1]['w'].ndim == 4)
        res_in = x if (residual and idx == 3) else None
        if is_3x3:
            h = conv3x3(h, cp['w'], cp['b'], gelu_out=gelu_out, residual=res_in)
        else:
            h = conv1x1(h, cp['w'], cp['b'], gelu_in=True,
                        gelu_out=gelu_out, residual=res_in)
    return h


# --------------------------- parameter initialization ------------------------

def init_conv1x1(key, cin, cout, scale=1.0, zero_w=False):
    kw, kb = jax.random.split(key)
    if zero_w:
        w = jnp.zeros((cin, cout), jnp.float32)
    else:
        w = jax.random.normal(kw, (cin, cout), jnp.float32) * (scale / math.sqrt(cin))
    b = jax.random.normal(kb, (cout,), jnp.float32) * 0.01
    return dict(w=w, b=b)


def init_conv3x3(key, cin, cout, scale=1.0):
    kw, kb = jax.random.split(key)
    w = jax.random.normal(kw, (3, 3, cin, cout), jnp.float32) * (scale / math.sqrt(9 * cin))
    b = jax.random.normal(kb, (cout,), jnp.float32) * 0.01
    return dict(w=w, b=b)


def init_block(key, in_w, mid_w, out_w, use_3x3, zero_last=False, last_scale=1.0):
    ks = jax.random.split(key, 4)
    mk = init_conv3x3 if use_3x3 else init_conv1x1
    return dict(
        c1=init_conv1x1(ks[0], in_w, mid_w),
        c2=mk(ks[1], mid_w, mid_w),
        c3=mk(ks[2], mid_w, mid_w),
        c4=init_conv1x1(ks[3], mid_w, out_w, scale=last_scale, zero_w=zero_last),
    )


def init_decoder(key, res_list, width_map, zdim, bottleneck_multiple,
                 output_res, n_blocks):
    params = dict(blocks=[], bias_xs={})
    keys = jax.random.split(key, len(res_list))
    for (res, mixin), k in zip(res_list, keys):
        w = width_map[res]
        cw = int(w * bottleneck_multiple)
        use_3x3 = res > 2
        kb = jax.random.split(k, 4)
        params['blocks'].append(dict(
            res=res, mixin=mixin, zdim=zdim,
            enc=init_block(kb[0], w * 2, cw, zdim * 2, use_3x3),
            prior=init_block(kb[1], w, cw, zdim * 2 + w, use_3x3, zero_last=True),
            z_proj=init_conv1x1(kb[2], zdim, w, scale=math.sqrt(1.0 / n_blocks)),
            resnet=init_block(kb[3], w, cw, w, use_3x3,
                              last_scale=math.sqrt(1.0 / n_blocks)),
        ))
        # bias_xs are zero-initialized parameters, stored NHWC here.
        params['bias_xs'][res] = jnp.zeros((1, res, res, w), jnp.float32)
    out_w = width_map[output_res]
    params['gain'] = jnp.ones((out_w,), jnp.float32)
    params['bias'] = jnp.zeros((out_w,), jnp.float32)
    params['output_res'] = output_res
    return params


# ------------------------------- forward pass --------------------------------

def dec_block_forward(blk, xs, activations, key, get_latents=False):
    res, mixin, zdim = blk['res'], blk['mixin'], blk['zdim']
    acts = activations[res]                       # (B,H,W,w)
    x = xs.get(res)
    if x is None:
        x = jnp.zeros_like(acts)
    if x.shape[0] != acts.shape[0]:
        x = jnp.tile(x, (acts.shape[0], 1, 1, 1))
    if mixin is not None:
        scale = res // mixin
        low = xs[mixin][..., :x.shape[-1]]        # channel slice (NHWC -> last axis)
        x = x + jnp.repeat(jnp.repeat(low, scale, axis=1), scale, axis=2)

    B, H, W, _ = x.shape
    # posterior q(z|x): enc(cat(x, acts)) -> (qm, qv)
    qmv = block_apply(blk['enc'], jnp.concatenate([x, acts], axis=-1), residual=False)
    qm, qv = qmv[..., :zdim], qmv[..., zdim:]
    # prior p(z): prior(x) -> (pm, pv, xpp)
    feats = block_apply(blk['prior'], x, residual=False)
    pm, pv, xpp = feats[..., :zdim], feats[..., zdim:2 * zdim], feats[..., 2 * zdim:]
    x = x + xpp

    eps = jax.random.normal(key, (B, H, W, zdim), jnp.float32)
    z, kl = sample_and_kl(qm, qv, pm, pv, eps)

    # x = x + z_proj(z)  (residual fused into the matmul epilogue)
    x = conv1x1(z, blk['z_proj']['w'], blk['z_proj']['b'],
                gelu_in=False, residual=x)
    # x = x + resnet(x)  (residual fused into c4's epilogue)
    x = block_apply(blk['resnet'], x, residual=True)

    xs = dict(xs)
    xs[res] = x
    stat = dict(kl=kl, z=z) if get_latents else dict(kl=kl)
    return xs, stat


def decoder_forward(params, activations_nchw, key, get_latents=False):
    # NCHW (PyTorch convention) -> NHWC (kernel layout)
    activations = {r: jnp.transpose(a, (0, 2, 3, 1))
                   for r, a in activations_nchw.items()}
    B = next(iter(activations.values())).shape[0]
    xs = {res: jnp.tile(bias, (B, 1, 1, 1))
          for res, bias in params['bias_xs'].items()}
    stats = []
    keys = jax.random.split(key, len(params['blocks']))
    for blk, k in zip(params['blocks'], keys):
        xs, stat = dec_block_forward(blk, xs, activations, k, get_latents=get_latents)
        stats.append(stat)

    out = scale_shift(xs[params['output_res']], params['gain'], params['bias'])
    out = jnp.transpose(out, (0, 3, 1, 2))        # back to NCHW
    stats = [{k2: jnp.transpose(v, (0, 3, 1, 2)) for k2, v in s.items()}
             for s in stats]
    return out, stats


# TODO(synk): DmolNet (self.out_net) is only used by forward_uncond /
# forward_manual_latents, not by forward(); it is not implemented here.


# ---------------------------------- main --------------------------------------

if __name__ == "__main__":
    key = jax.random.PRNGKey(0)
    res_list = [(4, None), (8, 4), (16, 8)]
    width_map = {4: 48, 8: 40, 16: 32}
    zdim = 8
    bottleneck_multiple = 0.25
    output_res = 16
    n_blocks = len(res_list)

    pkey, akey, skey = jax.random.split(key, 3)
    params = init_decoder(pkey, res_list, width_map, zdim,
                          bottleneck_multiple, output_res, n_blocks)

    B = 2
    akeys = jax.random.split(akey, len(res_list))
    activations = {res: jax.random.normal(k, (B, width_map[res], res, res),
                                          jnp.float32)
                   for (res, _), k in zip(res_list, akeys)}

    out, stats = decoder_forward(params, activations, skey)
    out = jax.block_until_ready(out)
    for s in stats:
        jax.block_until_ready(s['kl'])

    assert out.shape == (B, width_map[output_res], output_res, output_res)
    assert len(stats) == n_blocks
    for (res, _), s in zip(res_list, stats):
        assert s['kl'].shape == (B, zdim, res, res)
    print("KERNEL_OK")
</pallas_src>

<mosaic_0001>
module attributes {stable_mosaic.version = 11 : i64} {
  func.func @_mm_kernel(%arg0: i32, %arg1: memref<32x96xf32, #tpu.memory_space<vmem>>, %arg2: memref<96x12xbf16, #tpu.memory_space<vmem>>, %arg3: memref<1x12xf32, #tpu.memory_space<vmem>>, %arg4: memref<32x12xf32, #tpu.memory_space<vmem>>) attributes {dimension_semantics = [#tpu.dimension_semantics<parallel>], iteration_bounds = array<i64: 1>, scalar_prefetch = 0 : i64, scratch_operands = 0 : i64, tpu.core_type = #tpu.core_type<tc>, window_params = [{transform_indices = @transform_0, window_bounds = array<i64: 32, 96>}, {pipeline_mode = #tpu.pipeline_mode<synchronous>, transform_indices = @transform_1, window_bounds = array<i64: 96, 12>}, {pipeline_mode = #tpu.pipeline_mode<synchronous>, transform_indices = @transform_2, window_bounds = array<i64: 1, 12>}, {transform_indices = @transform_3, window_bounds = array<i64: 32, 12>}]} {
    %c0 = arith.constant 0 : index
    %c0_0 = arith.constant 0 : index
    %0 = vector.load %arg1[%c0, %c0_0] : memref<32x96xf32, #tpu.memory_space<vmem>>, vector<32x96xf32>
    %cst = arith.constant 5.000000e-01 : f32
    %1 = vector.broadcast %cst : f32 to vector<32x96xf32>
    %2 = arith.mulf %1, %0 : vector<32x96xf32>
    %cst_1 = arith.constant 0.707106769 : f32
    %3 = vector.broadcast %cst_1 : f32 to vector<32x96xf32>
    %4 = arith.mulf %0, %3 : vector<32x96xf32>
    %5 = math.erf %4 : vector<32x96xf32>
    %cst_2 = arith.constant 1.000000e+00 : f32
    %6 = vector.broadcast %cst_2 : f32 to vector<32x96xf32>
    %7 = arith.addf %6, %5 : vector<32x96xf32>
    %8 = arith.mulf %2, %7 : vector<32x96xf32>
    %9 = arith.truncf %8 : vector<32x96xf32> to vector<32x96xbf16>
    %c0_3 = arith.constant 0 : index
    %c0_4 = arith.constant 0 : index
    %10 = vector.load %arg2[%c0_3, %c0_4] : memref<96x12xbf16, #tpu.memory_space<vmem>>, vector<96x12xbf16>
    %cst_5 = arith.constant dense<0.000000e+00> : vector<32x12xf32>
    %11 = tpu.matmul %9, %10, %cst_5 {dimension_numbers = #tpu.dot_dimension_numbers<[1], [0], [0], [1], [0, 0, 1, 1], [], []>} : vector<32x96xbf16>, vector<96x12xbf16>, vector<32x12xf32> -> vector<32x12xf32>
    %c0_6 = arith.constant 0 : index
    %c0_7 = arith.constant 0 : index
    %12 = vector.load %arg3[%c0_6, %c0_7] : memref<1x12xf32, #tpu.memory_space<vmem>>, vector<1x12xf32>
    %13 = vector.broadcast %12 : vector<1x12xf32> to vector<32x12xf32>
    %14 = arith.addf %11, %13 : vector<32x12xf32>
    %cst_8 = arith.constant 5.000000e-01 : f32
    %15 = vector.broadcast %cst_8 : f32 to vector<32x12xf32>
    %16 = arith.mulf %15, %14 : vector<32x12xf32>
    %cst_9 = arith.constant 0.707106769 : f32
    %17 = vector.broadcast %cst_9 : f32 to vector<32x12xf32>
    %18 = arith.mulf %14, %17 : vector<32x12xf32>
    %19 = math.erf %18 : vector<32x12xf32>
    %cst_10 = arith.constant 1.000000e+00 : f32
    %20 = vector.broadcast %cst_10 : f32 to vector<32x12xf32>
    %21 = arith.addf %20, %19 : vector<32x12xf32>
    %22 = arith.mulf %16, %21 : vector<32x12xf32>
    %c0_11 = arith.constant 0 : index
    %c0_12 = arith.constant 0 : index
    %23 = vector.load %arg4[%c0_11, %c0_12] : memref<32x12xf32, #tpu.memory_space<vmem>>, vector<32x12xf32>
    tpu.vector_store %arg4[%c0_11, %c0_12], %22 {strides = array<i32>} : memref<32x12xf32, #tpu.memory_space<vmem>>, vector<32x12xf32>,
    return
  }
  func.func @transform_0(%arg0: i32) -> (i32, i32) {
    %c0_i32 = arith.constant 0 : i32
    %c0_i32_0 = arith.constant 0 : i32
    return %arg0, %c0_i32 : i32, i32
  }
  func.func @transform_1(%arg0: i32) -> (i32, i32) {
    %c0_i32 = arith.constant 0 : i32
    %c0_i32_0 = arith.constant 0 : i32
    %c0_i32_1 = arith.constant 0 : i32
    return %c0_i32, %c0_i32_0 : i32, i32
  }
  func.func @transform_2(%arg0: i32) -> (i32, i32) {
    %c0_i32 = arith.constant 0 : i32
    %c0_i32_0 = arith.constant 0 : i32
    %c0_i32_1 = arith.constant 0 : i32
    return %c0_i32, %c0_i32_0 : i32, i32
  }
  func.func @transform_3(%arg0: i32) -> (i32, i32) {
    %c0_i32 = arith.constant 0 : i32
    %c0_i32_0 = arith.constant 0 : i32
    return %arg0, %c0_i32 : i32, i32
  }
}

</mosaic_0001>

<llo_original>
// kernel: tpu_custom_call.1
$region0: #{tpu_custom_call.1}
  #allocation0 [shape = 'u32[]', space=smem, size = 0x4, offset = 0x4, fixed_abs, tag = 'smem constant byte address 0x4 - core index']
  #allocation1 [shape = 'u32[144,128]{1,0:T(1,128)}', space=vmem, size = 0x12000, scoped, tag = 'internal scratch']
  %s0 = inlined_call_operand.vmem [shape: f32[32,96], index: 0, kind: input, shape index: {}]
  %s1 = inlined_call_operand.vmem [shape: bf16[96,12], index: 1, kind: input, shape index: {}]
  %s2 = inlined_call_operand.vmem [shape: f32[1,12], index: 2, kind: input, shape index: {}]
  %s3 = inlined_call_operand.vmem [shape: f32[32,12], index: 3, kind: output, shape index: {}]
  %s4 = sld [smem:[#allocation0]]
  $region22: #{tpu_custom_call.1} parent=0
    _
  %s6 = ssub.s32 1, %s4
  %s7 = scalar_select 0, %s6, %s4
  // Predicated region
  $region2: #{tpu_custom_call.1} parent=0 // pred_check
    _
  $region3: #{tpu_custom_call.1} parent=0 // pred_check_branch
    %9 = sbr.rel (0) target = $region5
  $region4: #{tpu_custom_call.1} parent=0 // pred_region
    _
  $region5: #{tpu_custom_call.1} parent=0 // pred_fallthru
    _
  // Predicated region
  $region6: #{tpu_custom_call.1} parent=0 // pred_check
    _
  $region7: #{tpu_custom_call.1} parent=0 // pred_check_branch
    %11 = sbr.rel (0) target = $region9
  $region8: #{tpu_custom_call.1} parent=0 // pred_region
    _
  $region9: #{tpu_custom_call.1} parent=0 // pred_fallthru
    _
  // Predicated region
  $region10: #{tpu_custom_call.1} parent=0 // pred_check
    _
  $region11: #{tpu_custom_call.1} parent=0 // pred_check_branch
    %13 = sbr.rel (0) target = $region13
  $region12: #{tpu_custom_call.1} parent=0 // pred_region
    _
  $region13: #{tpu_custom_call.1} parent=0 // pred_fallthru
    _
  %v15 = vld [vmem:[%s0] sm:$0xff]
  %v16 = vld [vmem:[%s0 + $0x8] sm:$0xff]
  %v17 = vld [vmem:[%s0 + $0x10] sm:$0xff]
  %v18 = vld [vmem:[%s0 + $0x18] sm:$0xff]
  %v19 = vmul.f32 %v15, 0.5
  %v20 = vmul.f32 %v16, 0.5
  %v21 = vmul.f32 %v17, 0.5
  %v22 = vmul.f32 %v18, 0.5
  %v23 = vmul.f32 %v15, 0.70710677
  %v24 = vmul.f32 %v16, 0.70710677
  %v25 = vmul.f32 %v17, 0.70710677
  %v26 = vmul.f32 %v18, 0.70710677
  %v27 = verf.f32.pop %v23
  %v28 = verf.f32.pop %v24
  %v29 = verf.f32.pop %v25
  %v30 = verf.f32.pop %v26
  %v31 = vadd.f32 %v27, 1.0
  %v32 = vadd.f32 %v28, 1.0
  %v33 = vadd.f32 %v29, 1.0
  %v34 = vadd.f32 %v30, 1.0
  %v35 = vmul.f32 %v19, %v31
  %v36 = vmul.f32 %v20, %v32
  %v37 = vmul.f32 %v21, %v33
  %v38 = vmul.f32 %v22, %v34
  %v39 = vpack.c.bf16 %v36, %v35
  %v40 = vpack.c.bf16 %v38, %v37
  %v41 = vld [vmem:[%s1] sm:$0xf]
  %v42 = vld [vmem:[%s1 + $0x4] sm:$0xf]
  %v43 = vld [vmem:[%s1 + $0x8] sm:$0xf]
  %v44 = vld [vmem:[%s1 + $0xc] sm:$0xf]
  %v45 = vld [vmem:[%s1 + $0x10] sm:$0xf]
  %v46 = vld [vmem:[%s1 + $0x14] sm:$0xf]
  %v47 = vld [vmem:[%s1 + $0x18] sm:$0xf]
  %v48 = vld [vmem:[%s1 + $0x1c] sm:$0xf]
  %v49 = vld [vmem:[%s1 + $0x20] sm:$0xf]
  %v50 = vld [vmem:[%s1 + $0x24] sm:$0xf]
  %v51 = vld [vmem:[%s1 + $0x28] sm:$0xf]
  %v52 = vld [vmem:[%s1 + $0x2c] sm:$0xf]
  %v53 = vld [vmem:[%s2] sm:$0x1]
  %v55 = vlaneseq
  %v56 = vshrl.u32 %v55, 7
  %v57 = vsub.s32 0, %v56
  %v58 = vrot.slane %v53, %v57
  %v72 = vunpack.c.l.b16 %v41
  %v73 = vunpack.c.l.b16 %v42
  %v74 = vunpack.c.l.b16 %v43
  %v75 = vunpack.c.l.b16 %v44
  %v76 = vunpack.c.l.b16 %v45
  %v77 = vunpack.c.l.b16 %v46
  %v78 = vunpack.c.l.b16 %v47
  %v79 = vunpack.c.l.b16 %v48
  %v80 = vunpack.c.l.b16 %v49
  %v81 = vunpack.c.l.b16 %v50
  %v82 = vunpack.c.l.b16 %v51
  %v83 = vunpack.c.l.b16 %v52
  %v84 = vpack.c.b16 %v73, %v72
  %v85 = vpack.c.b16 %v75, %v74
  %v86 = vpack.c.b16 %v77, %v76
  %v87 = vpack.c.b16 %v79, %v78
  %v88 = vpack.c.b16 %v81, %v80
  %v89 = vpack.c.b16 %v83, %v82
  %vm96 = vcmask 785408
  %v98 = vsel %vm96, %v39, 0
  %v101 = vsel %vm96, %v40, 0
  %103 = vmatprep.subr.bf16.mxu0 0
  %104 = vmatpush1.bf16.msra.mxu0 0
  %105 = vmatprep.subr.bf16.mxu0 0
  %106 = vmatpush1.bf16.msra.mxu0 0
  %107 = vmatprep.subr.bf16.mxu0 0
  %108 = vmatpush1.bf16.msra.mxu0 %v89
  %109 = vmatprep.subr.bf16.mxu0 0
  %110 = vmatpush1.bf16.msra.mxu0 %v88
  %111 = vmatprep.subr.bf16.mxu0 0
  %112 = vmatpush1.bf16.msra.mxu0 %v87
  %113 = vmatprep.subr.bf16.mxu0 0
  %114 = vmatpush1.bf16.msra.mxu0 %v86
  %115 = vmatprep.subr.bf16.mxu0 0
  %116 = vmatpush1.bf16.msra.mxu0 %v85
  %117 = vmatprep.subr.bf16.mxu0 0
  %118 = vmatpush1.bf16.msra.mxu0 %v84
  %119 = vmatprep.subr.bf16.mxu0 0
  %120 = vmatpush2.bf16.msra.mxu0 0
  %121 = vmatprep.subr.bf16.mxu0 0
  %122 = vmatpush2.bf16.msra.mxu0 0
  %123 = vmatprep.subr.bf16.mxu0 0
  %124 = vmatpush2.bf16.msra.mxu0 0
  %125 = vmatprep.subr.bf16.mxu0 0
  %126 = vmatpush2.bf16.msra.mxu0 0
  %127 = vmatprep.subr.bf16.mxu0 0
  %128 = vmatpush2.bf16.msra.mxu0 0
  %129 = vmatprep.subr.bf16.mxu0 0
  %130 = vmatpush2.bf16.msra.mxu0 0
  %131 = vmatprep.subr.bf16.mxu0 0
  %132 = vmatpush2.bf16.msra.mxu0 0
  %133 = vmatprep.subr.bf16.mxu0 0
  %134 = vmatpush2.bf16.msra.mxu0 0
  %135 = vmatprep.mubr.bf16.mxu0 0
  %136 = vmatmul.mubr.bf16.gmra.mxu0 %v98
  %v137 = vpop.f32.mrf.mxu0
  %v138 = vadd.f32 %v58, %v137
  %v139 = vpop.f32.mrf.mxu0
  %v140 = vpop.f32.mrf.mxu0
  %v141 = vadd.f32 %v58, %v140
  %v142 = vpop.f32.mrf.mxu0
  %143 = vmatprep.mubr.bf16.mxu0 0
  %144 = vmatmul.mubr.bf16.gmra.mxu0 %v101
  %v145 = vpop.f32.mrf.mxu0
  %v146 = vadd.f32 %v58, %v145
  %v147 = vpop.f32.mrf.mxu0
  %v148 = vpop.f32.mrf.mxu0
  %v149 = vadd.f32 %v58, %v148
  %v150 = vpop.f32.mrf.mxu0
  %151 = vdwg.mxu0
  %v152 = vmul.f32 %v138, 0.5
  %v153 = vmul.f32 %v141, 0.5
  %v154 = vmul.f32 %v146, 0.5
  %v155 = vmul.f32 %v149, 0.5
  %v156 = vmul.f32 %v138, 0.70710677
  %v157 = vmul.f32 %v141, 0.70710677
  %v158 = vmul.f32 %v146, 0.70710677
  %v159 = vmul.f32 %v149, 0.70710677
  %v160 = verf.f32.pop %v156
  %v161 = verf.f32.pop %v157
  %v162 = verf.f32.pop %v158
  %v163 = verf.f32.pop %v159
  %v164 = vadd.f32 %v160, 1.0
  %v165 = vadd.f32 %v161, 1.0
  %v166 = vadd.f32 %v162, 1.0
  %v167 = vadd.f32 %v163, 1.0
  %v168 = vmul.f32 %v152, %v164
  %v169 = vmul.f32 %v153, %v165
  %v170 = vmul.f32 %v154, %v166
  %v171 = vmul.f32 %v155, %v167
  %vm172 = vcmask 97280
  %173 = vst.msk [vmem:[%s3] sm:$0xff] %vm172, %v168
  %174 = vst.msk [vmem:[%s3 + $0x8] sm:$0xff] %vm172, %v169
  %175 = vst.msk [vmem:[%s3 + $0x10] sm:$0xff] %vm172, %v170
  %176 = vst.msk [vmem:[%s3 + $0x18] sm:$0xff] %vm172, %v171
  // Predicated region
  $region14: #{tpu_custom_call.1} parent=0 // pred_check
    _
  $region15: #{tpu_custom_call.1} parent=0 // pred_check_branch
    %178 = sbr.rel (0) target = $region17
  $region16: #{tpu_custom_call.1} parent=0 // pred_region
    _
  $region17: #{tpu_custom_call.1} parent=0 // pred_fallthru
    _
  // Predicated region
  $region18: #{tpu_custom_call.1} parent=0 // pred_check
    _
  $region19: #{tpu_custom_call.1} parent=0 // pred_check_branch
    %180 = sbr.rel (0) target = $region21
  $region20: #{tpu_custom_call.1} parent=0 // pred_region
    _
  $region21: #{tpu_custom_call.1} parent=0 // pred_fallthru
    _

</llo_original>
